<compile_context>
chip_gen: v5e
topology: v5e:2x2
jax: 0.10.0
libtpu: 0.0.40
codegen_flags: <defaults>
</compile_context>

<pallas_src>
import functools

import jax
import jax.numpy as jnp
import numpy as np
from jax.experimental import pallas as pl
from jax.experimental.pallas import tpu as pltpu

LANE = 128     # lane-axis padding quantum (interior / output feature dims)
SUBLANE = 8    # sublane-axis padding quantum for f32 (batch dim, input feature dim)


def _round_up(n, m):
    return ((n + m - 1) // m) * m


def _pad2(a, rows, cols):
    return jnp.pad(a, ((0, rows - a.shape[0]), (0, cols - a.shape[1])))


# ----------------------------- Fused Pallas kernel ------------------------------


def _fused_mlp_kernel(*refs, layer_specs, eps):
    """Entire MLP: x -> [Linear (+ReLU/Tanh) | LayerNorm+ReLU]* -> out, all in VMEM.

    refs = (x_ref, *param_refs, o_ref).  `layer_specs` (static Python) describes the
    sequence and how many param refs each step consumes.  Weights arrive as bf16
    (native MXU input dtype); all elementwise / LN / activation math stays in f32
    and the MXU accumulates in f32.
    """
    x_ref = refs[0]
    o_ref = refs[-1]
    param_refs = refs[1:-1]

    h = x_ref[...].astype(jnp.float32)
    idx = 0
    for spec in layer_specs:
        kind = spec[0]
        if kind == "linear":
            act = spec[1]
            w = param_refs[idx][...]                 # bf16, zero-padded
            b = param_refs[idx + 1][...]             # f32, (1, N) -> broadcasts over batch
            idx += 2
            h = jnp.dot(h.astype(jnp.bfloat16), w,
                        preferred_element_type=jnp.float32) + b
            if act == "relu":
                h = jnp.maximum(h, 0.0)
            elif act == "tanh":
                h = jnp.tanh(h)
        else:  # "ln_relu": LayerNorm over the REAL width, then ReLU
            real_width = spec[1]
            g = param_refs[idx][...]
            bb = param_refs[idx + 1][...]
            idx += 2
            # Single-pass mean / variance.  Padded lanes of h are exactly zero on entry
            # (the preceding Linear has zero-padded W/bias and 'none' activation), so
            # sums over the padded width equal sums over the real width; divide by the
            # real width for PyTorch (biased-variance) semantics.  Clamp var >= 0
            # against catastrophic cancellation of ss - mean^2.
            inv_d = 1.0 / float(real_width)
            s = jnp.sum(h, axis=-1, keepdims=True)
            ss = jnp.sum(h * h, axis=-1, keepdims=True)
            mean = s * inv_d
            var = jnp.maximum(ss * inv_d - mean * mean, 0.0)
            h = (h - mean) * jax.lax.rsqrt(var + eps)
            # gamma/beta are zero-padded -> padded lanes return to exactly zero.
            h = jnp.maximum(h * g + bb, 0.0)

    o_ref[...] = h.astype(o_ref.dtype)


# --------------------------- Parameter construction -----------------------------


def init_mlp_params(key, input_dim, output_dim, widths, ln=True):
    """Deterministic init mirroring nn.Linear default (uniform +/- 1/sqrt(fan_in))."""
    dims = [input_dim] + list(widths) + [output_dim]
    params = {"linears": [], "layernorms": []}
    for i in range(len(dims) - 1):
        fan_in, fan_out = dims[i], dims[i + 1]
        key, kw, kb = jax.random.split(key, 3)
        bound = 1.0 / np.sqrt(fan_in)
        w = jax.random.uniform(kw, (fan_in, fan_out), jnp.float32, -bound, bound)
        b = jax.random.uniform(kb, (fan_out,), jnp.float32, -bound, bound)
        params["linears"].append((w, b))
    if ln:
        for i in range(1, len(widths)):
            params["layernorms"].append(
                (jnp.ones((widths[i],), jnp.float32), jnp.zeros((widths[i],), jnp.float32))
            )
    return params


def prepare_fused_mlp(params, input_dim, output_dim, widths, ln=True, tanh_end=False):
    """Zero-pad every weight/bias/gamma/beta to lane-dense shapes ONCE (weights cast to
    bf16), and build the static layer schedule consumed by the fused kernel."""
    dims = [input_dim] + list(widths) + [output_dim]
    # Input dim: sublane (8) alignment only — it is a K dim and full-array blocks are
    # exempt from the 128 rule.  Interior widths / output dim stay 128 so every matmul
    # N axis and the final store are lane-dense.
    pdims = [_round_up(dims[0], SUBLANE)] + [_round_up(d, LANE) for d in dims[1:]]

    flat, specs = [], []

    def add_linear(i, act):
        w, b = params["linears"][i]
        flat.append(_pad2(w, pdims[i], pdims[i + 1]).astype(jnp.bfloat16))
        flat.append(_pad2(b.reshape(1, -1), 1, pdims[i + 1]))          # stays f32
        specs.append(("linear", act))

    add_linear(0, "relu")
    for i in range(len(widths) - 1):
        if ln:
            add_linear(i + 1, "none")
            g, bb = params["layernorms"][i]
            flat.append(_pad2(g.reshape(1, -1), 1, pdims[i + 2]))
            flat.append(_pad2(bb.reshape(1, -1), 1, pdims[i + 2]))
            specs.append(("ln_relu", widths[i + 1]))
        else:
            add_linear(i + 1, "relu")
    add_linear(len(dims) - 2, "tanh" if tanh_end else "none")

    return flat, tuple(specs), pdims


# ------------------------------- Forward wrapper ---------------------------------


def _choose_batch_tiling(batch):
    """Padded batch + batch tile: >=2 parallel grid steps when possible (v7x 2 TCs /
    megacore), tile capped at 256 rows (MXU M-dim on v6e/v7x)."""
    Bp = _round_up(batch, SUBLANE)
    if Bp < 2 * SUBLANE:
        return Bp, Bp                              # single grid step for tiny batches
    bt = min(256, _round_up(-(-Bp // 2), SUBLANE))
    return _round_up(Bp, bt), bt


def fused_mlp_forward(flat_params, layer_specs, pdims, x, output_dim, eps=1e-5):
    B, D_in = x.shape
    Bp, BT = _choose_batch_tiling(B)
    xp = jnp.pad(x, ((0, Bp - B), (0, pdims[0] - D_in)))
    grid = (Bp // BT,)

    in_specs = [pl.BlockSpec((BT, pdims[0]), lambda i: (i, 0))]
    for p in flat_params:
        # Parameters are grid-invariant (constant index_map): single-buffer them so
        # their VMEM footprint is 1x, not the default 2x double-buffer.
        in_specs.append(pl.BlockSpec(p.shape, lambda i: (0, 0),
                                     pipeline_mode=pl.Buffered(1)))
    # Output lane width stays at the padded 128 multiple (unmasked vst); the slice to
    # output_dim happens outside the kernel.
    out_spec = pl.BlockSpec((BT, pdims[-1]), lambda i: (i, 0))

    # Advisory cost estimate so XLA can schedule/overlap the call against neighbors.
    flops = 2 * Bp * sum(pdims[i] * pdims[i + 1] for i in range(len(pdims) - 1))
    transcendentals = Bp * pdims[-1] if layer_specs[-1] == ("linear", "tanh") else 0
    bytes_accessed = (xp.size * xp.dtype.itemsize
                      + Bp * pdims[-1] * x.dtype.itemsize
                      + sum(int(p.size) * p.dtype.itemsize for p in flat_params))
    cost = pl.CostEstimate(flops=flops, transcendentals=transcendentals,
                           bytes_accessed=bytes_accessed)

    # Explicit scoped-VMEM budget: one copy of every (layout-padded) parameter tile
    # plus double-buffered activation tiles + f32 intermediate headroom, clamped to
    # [16 MiB, 64 MiB] so it never exceeds v7x physical VMEM.
    vmem = 0
    for p in flat_params:
        vmem += max(p.shape[0], SUBLANE) * _round_up(p.shape[1], LANE) * p.dtype.itemsize
    act_cols = max(pdims)
    vmem += 2 * 2 * BT * act_cols * 4      # double-buffered x / out tiles
    vmem += 6 * BT * act_cols * 4          # live f32 intermediates headroom
    vmem_limit = int(min(max(2 * vmem, 16 * 1024 * 1024), 64 * 1024 * 1024))

    kernel = functools.partial(_fused_mlp_kernel, layer_specs=layer_specs, eps=eps)
    out = pl.pallas_call(
        kernel,
        out_shape=jax.ShapeDtypeStruct((Bp, pdims[-1]), x.dtype),
        grid=grid,
        in_specs=in_specs,
        out_specs=out_spec,
        compiler_params=pltpu.CompilerParams(
            dimension_semantics=("parallel",),
            vmem_limit_bytes=vmem_limit),
        cost_estimate=cost,
    )(xp, *flat_params)
    return out[:B, :output_dim]


# ---------------------------------- Reference -------------------------------------


def mlp_forward_ref(params, x, widths, ln=True, tanh_end=False, mm_dtype=jnp.float32):
    def mm(a, w):
        return jnp.dot(a.astype(mm_dtype), w.astype(mm_dtype),
                       preferred_element_type=jnp.float32)

    w, b = params["linears"][0]
    h = jnp.maximum(mm(x, w) + b, 0.0)
    for i in range(len(widths) - 1):
        w, b = params["linears"][i + 1]
        h = mm(h, w) + b
        if ln:
            g, bb = params["layernorms"][i]
            mu = jnp.mean(h, -1, keepdims=True)
            var = jnp.mean((h - mu) ** 2, -1, keepdims=True)
            h = (h - mu) * jax.lax.rsqrt(var + 1e-5) * g + bb
        h = jnp.maximum(h, 0.0)
    w, b = params["linears"][-1]
    y = mm(h, w) + b
    return jnp.tanh(y) if tanh_end else y


# ------------------------------------ Main -----------------------------------------

if __name__ == "__main__":
    key = jax.random.PRNGKey(0)
    batch, input_dim, output_dim = 4, 10, 10
    widths = [64, 64]  # two hidden widths so the LayerNorm branch is exercised
    ln, tanh_end = True, False

    kp, kx = jax.random.split(key)
    params = init_mlp_params(kp, input_dim, output_dim, widths, ln=ln)
    x = jax.random.normal(kx, (batch, input_dim), jnp.float32)

    flat_params, layer_specs, pdims = prepare_fused_mlp(
        params, input_dim, output_dim, widths, ln=ln, tanh_end=tanh_end
    )

    y = fused_mlp_forward(flat_params, layer_specs, pdims, x, output_dim)
    y = jax.block_until_ready(y)
    y = np.asarray(y)

    # Tight check vs. a reference using the same bf16-at-the-MXU mixed precision.
    y_ref_bf16 = np.asarray(
        mlp_forward_ref(params, x, widths, ln=ln, tanh_end=tanh_end, mm_dtype=jnp.bfloat16))
    np.testing.assert_allclose(y, y_ref_bf16, rtol=1e-2, atol=1e-2)

    # Loose check vs. the full-f32 reference (bf16 weight rounding is ~0.4%/layer).
    y_ref_f32 = np.asarray(
        mlp_forward_ref(params, x, widths, ln=ln, tanh_end=tanh_end, mm_dtype=jnp.float32))
    np.testing.assert_allclose(y, y_ref_f32, rtol=5e-2, atol=5e-2)

    print("KERNEL_OK")
</pallas_src>

<mosaic_0001>
module attributes {stable_mosaic.version = 11 : i64} {
  func.func @_fused_mlp_kernel(%arg0: i32, %arg1: memref<8x16xf32, #tpu.memory_space<vmem>>, %arg2: memref<16x128xbf16, #tpu.memory_space<vmem>>, %arg3: memref<1x128xf32, #tpu.memory_space<vmem>>, %arg4: memref<128x128xbf16, #tpu.memory_space<vmem>>, %arg5: memref<1x128xf32, #tpu.memory_space<vmem>>, %arg6: memref<1x128xf32, #tpu.memory_space<vmem>>, %arg7: memref<1x128xf32, #tpu.memory_space<vmem>>, %arg8: memref<128x128xbf16, #tpu.memory_space<vmem>>, %arg9: memref<1x128xf32, #tpu.memory_space<vmem>>, %arg10: memref<8x128xf32, #tpu.memory_space<vmem>>) attributes {dimension_semantics = [#tpu.dimension_semantics<parallel>], iteration_bounds = array<i64: 1>, scalar_prefetch = 0 : i64, scratch_operands = 0 : i64, tpu.core_type = #tpu.core_type<tc>, window_params = [{transform_indices = @transform_0, window_bounds = array<i64: 8, 16>}, {pipeline_mode = #tpu.pipeline_mode<synchronous>, transform_indices = @transform_1, window_bounds = array<i64: 16, 128>}, {pipeline_mode = #tpu.pipeline_mode<synchronous>, transform_indices = @transform_2, window_bounds = array<i64: 1, 128>}, {pipeline_mode = #tpu.pipeline_mode<synchronous>, transform_indices = @transform_3, window_bounds = array<i64: 128, 128>}, {pipeline_mode = #tpu.pipeline_mode<synchronous>, transform_indices = @transform_4, window_bounds = array<i64: 1, 128>}, {pipeline_mode = #tpu.pipeline_mode<synchronous>, transform_indices = @transform_5, window_bounds = array<i64: 1, 128>}, {pipeline_mode = #tpu.pipeline_mode<synchronous>, transform_indices = @transform_6, window_bounds = array<i64: 1, 128>}, {pipeline_mode = #tpu.pipeline_mode<synchronous>, transform_indices = @transform_7, window_bounds = array<i64: 128, 128>}, {pipeline_mode = #tpu.pipeline_mode<synchronous>, transform_indices = @transform_8, window_bounds = array<i64: 1, 128>}, {transform_indices = @transform_9, window_bounds = array<i64: 8, 128>}]} {
    %c0 = arith.constant 0 : index
    %c0_0 = arith.constant 0 : index
    %0 = vector.load %arg1[%c0, %c0_0] : memref<8x16xf32, #tpu.memory_space<vmem>>, vector<8x16xf32>
    %c0_1 = arith.constant 0 : index
    %c0_2 = arith.constant 0 : index
    %1 = vector.load %arg2[%c0_1, %c0_2] : memref<16x128xbf16, #tpu.memory_space<vmem>>, vector<16x128xbf16>
    %c0_3 = arith.constant 0 : index
    %c0_4 = arith.constant 0 : index
    %2 = vector.load %arg3[%c0_3, %c0_4] : memref<1x128xf32, #tpu.memory_space<vmem>>, vector<1x128xf32>
    %3 = arith.truncf %0 : vector<8x16xf32> to vector<8x16xbf16>
    %cst = arith.constant dense<0.000000e+00> : vector<8x128xf32>
    %4 = tpu.matmul %3, %1, %cst {dimension_numbers = #tpu.dot_dimension_numbers<[1], [0], [0], [1], [0, 0, 1, 1], [], []>} : vector<8x16xbf16>, vector<16x128xbf16>, vector<8x128xf32> -> vector<8x128xf32>
    %5 = vector.broadcast %2 : vector<1x128xf32> to vector<8x128xf32>
    %6 = arith.addf %4, %5 : vector<8x128xf32>
    %cst_5 = arith.constant 0.000000e+00 : f32
    %7 = vector.broadcast %cst_5 : f32 to vector<8x128xf32>
    %8 = arith.maximumf %6, %7 : vector<8x128xf32>
    %c0_6 = arith.constant 0 : index
    %c0_7 = arith.constant 0 : index
    %9 = vector.load %arg4[%c0_6, %c0_7] : memref<128x128xbf16, #tpu.memory_space<vmem>>, vector<128x128xbf16>
    %c0_8 = arith.constant 0 : index
    %c0_9 = arith.constant 0 : index
    %10 = vector.load %arg5[%c0_8, %c0_9] : memref<1x128xf32, #tpu.memory_space<vmem>>, vector<1x128xf32>
    %11 = arith.truncf %8 : vector<8x128xf32> to vector<8x128xbf16>
    %cst_10 = arith.constant dense<0.000000e+00> : vector<8x128xf32>
    %12 = tpu.matmul %11, %9, %cst_10 {dimension_numbers = #tpu.dot_dimension_numbers<[1], [0], [0], [1], [0, 0, 1, 1], [], []>} : vector<8x128xbf16>, vector<128x128xbf16>, vector<8x128xf32> -> vector<8x128xf32>
    %13 = vector.broadcast %10 : vector<1x128xf32> to vector<8x128xf32>
    %14 = arith.addf %12, %13 : vector<8x128xf32>
    %c0_11 = arith.constant 0 : index
    %c0_12 = arith.constant 0 : index
    %15 = vector.load %arg6[%c0_11, %c0_12] : memref<1x128xf32, #tpu.memory_space<vmem>>, vector<1x128xf32>
    %c0_13 = arith.constant 0 : index
    %c0_14 = arith.constant 0 : index
    %16 = vector.load %arg7[%c0_13, %c0_14] : memref<1x128xf32, #tpu.memory_space<vmem>>, vector<1x128xf32>
    %cst_15 = arith.constant dense<0.000000e+00> : vector<8xf32>
    %17 = vector.multi_reduction <add>, %14, %cst_15 [1] : vector<8x128xf32> to vector<8xf32>
    %18 = vector.shape_cast %17 : vector<8xf32> to vector<8x1xf32>
    %19 = arith.mulf %14, %14 : vector<8x128xf32>
    %cst_16 = arith.constant dense<0.000000e+00> : vector<8xf32>
    %20 = vector.multi_reduction <add>, %19, %cst_16 [1] : vector<8x128xf32> to vector<8xf32>
    %21 = vector.shape_cast %20 : vector<8xf32> to vector<8x1xf32>
    %cst_17 = arith.constant 1.562500e-02 : f32
    %22 = vector.broadcast %cst_17 : f32 to vector<8x1xf32>
    %23 = arith.mulf %18, %22 : vector<8x1xf32>
    %cst_18 = arith.constant 1.562500e-02 : f32
    %24 = vector.broadcast %cst_18 : f32 to vector<8x1xf32>
    %25 = arith.mulf %21, %24 : vector<8x1xf32>
    %26 = arith.mulf %23, %23 : vector<8x1xf32>
    %27 = arith.subf %25, %26 : vector<8x1xf32>
    %cst_19 = arith.constant 0.000000e+00 : f32
    %28 = vector.broadcast %cst_19 : f32 to vector<8x1xf32>
    %29 = arith.maximumf %27, %28 : vector<8x1xf32>
    %30 = vector.broadcast %23 : vector<8x1xf32> to vector<8x128xf32>
    %31 = arith.subf %14, %30 : vector<8x128xf32>
    %cst_20 = arith.constant 9.99999974E-6 : f32
    %32 = vector.broadcast %cst_20 : f32 to vector<8x1xf32>
    %33 = arith.addf %29, %32 : vector<8x1xf32>
    %34 = math.rsqrt %33 : vector<8x1xf32>
    %35 = vector.broadcast %34 : vector<8x1xf32> to vector<8x128xf32>
    %36 = arith.mulf %31, %35 : vector<8x128xf32>
    %37 = vector.broadcast %15 : vector<1x128xf32> to vector<8x128xf32>
    %38 = arith.mulf %36, %37 : vector<8x128xf32>
    %39 = vector.broadcast %16 : vector<1x128xf32> to vector<8x128xf32>
    %40 = arith.addf %38, %39 : vector<8x128xf32>
    %cst_21 = arith.constant 0.000000e+00 : f32
    %41 = vector.broadcast %cst_21 : f32 to vector<8x128xf32>
    %42 = arith.maximumf %40, %41 : vector<8x128xf32>
    %c0_22 = arith.constant 0 : index
    %c0_23 = arith.constant 0 : index
    %43 = vector.load %arg8[%c0_22, %c0_23] : memref<128x128xbf16, #tpu.memory_space<vmem>>, vector<128x128xbf16>
    %c0_24 = arith.constant 0 : index
    %c0_25 = arith.constant 0 : index
    %44 = vector.load %arg9[%c0_24, %c0_25] : memref<1x128xf32, #tpu.memory_space<vmem>>, vector<1x128xf32>
    %45 = arith.truncf %42 : vector<8x128xf32> to vector<8x128xbf16>
    %cst_26 = arith.constant dense<0.000000e+00> : vector<8x128xf32>
    %46 = tpu.matmul %45, %43, %cst_26 {dimension_numbers = #tpu.dot_dimension_numbers<[1], [0], [0], [1], [0, 0, 1, 1], [], []>} : vector<8x128xbf16>, vector<128x128xbf16>, vector<8x128xf32> -> vector<8x128xf32>
    %47 = vector.broadcast %44 : vector<1x128xf32> to vector<8x128xf32>
    %48 = arith.addf %46, %47 : vector<8x128xf32>
    %c0_27 = arith.constant 0 : index
    %c0_28 = arith.constant 0 : index
    %49 = vector.load %arg10[%c0_27, %c0_28] : memref<8x128xf32, #tpu.memory_space<vmem>>, vector<8x128xf32>
    tpu.vector_store %arg10[%c0_27, %c0_28], %48 {strides = array<i32>} : memref<8x128xf32, #tpu.memory_space<vmem>>, vector<8x128xf32>,
    return
  }
  func.func @transform_0(%arg0: i32) -> (i32, i32) {
    %c0_i32 = arith.constant 0 : i32
    %c0_i32_0 = arith.constant 0 : i32
    return %arg0, %c0_i32 : i32, i32
  }
  func.func @transform_1(%arg0: i32) -> (i32, i32) {
    %c0_i32 = arith.constant 0 : i32
    %c0_i32_0 = arith.constant 0 : i32
    %c0_i32_1 = arith.constant 0 : i32
    return %c0_i32, %c0_i32_0 : i32, i32
  }
  func.func @transform_2(%arg0: i32) -> (i32, i32) {
    %c0_i32 = arith.constant 0 : i32
    %c0_i32_0 = arith.constant 0 : i32
    %c0_i32_1 = arith.constant 0 : i32
    return %c0_i32, %c0_i32_0 : i32, i32
  }
  func.func @transform_3(%arg0: i32) -> (i32, i32) {
    %c0_i32 = arith.constant 0 : i32
    %c0_i32_0 = arith.constant 0 : i32
    %c0_i32_1 = arith.constant 0 : i32
    return %c0_i32, %c0_i32_0 : i32, i32
  }
  func.func @transform_4(%arg0: i32) -> (i32, i32) {
    %c0_i32 = arith.constant 0 : i32
    %c0_i32_0 = arith.constant 0 : i32
    %c0_i32_1 = arith.constant 0 : i32
    return %c0_i32, %c0_i32_0 : i32, i32
  }
  func.func @transform_5(%arg0: i32) -> (i32, i32) {
    %c0_i32 = arith.constant 0 : i32
    %c0_i32_0 = arith.constant 0 : i32
    %c0_i32_1 = arith.constant 0 : i32
    return %c0_i32, %c0_i32_0 : i32, i32
  }
  func.func @transform_6(%arg0: i32) -> (i32, i32) {
    %c0_i32 = arith.constant 0 : i32
    %c0_i32_0 = arith.constant 0 : i32
    %c0_i32_1 = arith.constant 0 : i32
    return %c0_i32, %c0_i32_0 : i32, i32
  }
  func.func @transform_7(%arg0: i32) -> (i32, i32) {
    %c0_i32 = arith.constant 0 : i32
    %c0_i32_0 = arith.constant 0 : i32
    %c0_i32_1 = arith.constant 0 : i32
    return %c0_i32, %c0_i32_0 : i32, i32
  }
  func.func @transform_8(%arg0: i32) -> (i32, i32) {
    %c0_i32 = arith.constant 0 : i32
    %c0_i32_0 = arith.constant 0 : i32
    %c0_i32_1 = arith.constant 0 : i32
    return %c0_i32, %c0_i32_0 : i32, i32
  }
  func.func @transform_9(%arg0: i32) -> (i32, i32) {
    %c0_i32 = arith.constant 0 : i32
    %c0_i32_0 = arith.constant 0 : i32
    return %arg0, %c0_i32 : i32, i32
  }
}

</mosaic_0001>

<llo_original>
// kernel: tpu_custom_call.1
$region0: #{tpu_custom_call.1}
  #allocation0 [shape = 'u32[]', space=smem, size = 0x4, offset = 0x4, fixed_abs, tag = 'smem constant byte address 0x4 - core index']
  #allocation1 [shape = 'u32[72,128]{1,0:T(1,128)}', space=vmem, size = 0x9000, scoped, tag = 'internal scratch']
  %s0 = inlined_call_operand.hbm [shape: f32[8,16], index: 0, kind: input, shape index: {}]
  %s1 = inlined_call_operand.hbm [shape: bf16[16,128], index: 1, kind: input, shape index: {}]
  %s2 = inlined_call_operand.vmem [shape: f32[1,128], index: 2, kind: input, shape index: {}]
  %s3 = inlined_call_operand.hbm [shape: bf16[128,128], index: 3, kind: input, shape index: {}]
  %s4 = inlined_call_operand.vmem [shape: f32[1,128], index: 4, kind: input, shape index: {}]
  %s5 = inlined_call_operand.vmem [shape: f32[1,128], index: 5, kind: input, shape index: {}]
  %s6 = inlined_call_operand.vmem [shape: f32[1,128], index: 6, kind: input, shape index: {}]
  %s7 = inlined_call_operand.hbm [shape: bf16[128,128], index: 7, kind: input, shape index: {}]
  %s8 = inlined_call_operand.vmem [shape: f32[1,128], index: 8, kind: input, shape index: {}]
  %s9 = inlined_call_operand.hbm [shape: f32[8,128], index: 9, kind: output, shape index: {}]
  %s10 = sld [smem:[#allocation0]]
  $region62: #{tpu_custom_call.1} parent=0
    _
  %s12 = ssub.s32 1, %s10
  %s13 = scalar_select 0, %s12, %s10
  $region1: #{tpu_custom_call.1} parent=0
    #allocation2 [shape = 'u8[4096]{0}', space=vmem, size = 0x1000, scoped, tag = 'input window, operand 0, single buffered']
    #allocation3 [shape = 's32[1]{0}', space=sflag, size = 0x4, scoped, tag = 'scoped memory for tpu_custom_call.1']
    #allocation4 [shape = 's32[1]{0}', space=sflag, size = 0x4, scoped, tag = 'scoped memory for tpu_custom_call.1']
    #allocation5 [shape = 'u8[4096]{0}', space=vmem, size = 0x1000, scoped, tag = 'input window, operand 1, single buffered']
    #allocation6 [shape = 's32[1]{0}', space=sflag, size = 0x4, scoped, tag = 'scoped memory for tpu_custom_call.1']
    #allocation7 [shape = 'u8[32768]{0}', space=vmem, size = 0x8000, scoped, tag = 'input window, operand 3, single buffered']
    #allocation8 [shape = 'u8[32768]{0}', space=vmem, size = 0x8000, scoped, tag = 'input window, operand 7, single buffered']
    #allocation9 [shape = 's32[1]{0}', space=sflag, size = 0x4, scoped, tag = 'scoped memory for tpu_custom_call.1']
    #allocation10 [shape = 'u8[4096]{0}', space=vmem, size = 0x1000, scoped, tag = 'output window, operand 0, single buffered']
    %14 = vsyncpa [#allocation3], 0
    %15 = vsyncpa [#allocation6], 0
    %16 = vsyncpa [#allocation9], 0
    %17 = vsyncpa [#allocation4], 0
    // Predicated region
    $region2: #{tpu_custom_call.1} parent=1 // pred_check
      _
    $region3: #{tpu_custom_call.1} parent=1 // pred_check_branch
      %19 = sbr.rel (0) target = $region5
    $region4: #{tpu_custom_call.1} parent=1 // pred_region
      %21 = vsyncadd [#allocation3], 0
      %s23 = sshll.u32 %s0, 4
      %s24 = int_to_ptr.hbm [resolvable:$true] %s23
      %s25 = sshll.u32 [#allocation2], 4
      %s26 = int_to_ptr.vmem [resolvable:$true] %s25
      %28 = dma.hbm_to_vmem [thread:$0]  %s24, 128, %s26, [#allocation3]
    $region5: #{tpu_custom_call.1} parent=1 // pred_fallthru
      _
    // Predicated region
    $region6: #{tpu_custom_call.1} parent=1 // pred_check
      _
    $region7: #{tpu_custom_call.1} parent=1 // pred_check_branch
      %30 = sbr.rel (0) target = $region9
    $region8: #{tpu_custom_call.1} parent=1 // pred_region
      %32 = vsyncadd [#allocation6], 0
      %s33 = sshll.u32 %s1, 4
      %s34 = int_to_ptr.hbm [resolvable:$true] %s33
      %s35 = sshll.u32 [#allocation5], 4
      %s36 = int_to_ptr.vmem [resolvable:$true] %s35
      %41 = dma.hbm_to_vmem [thread:$0]  %s34, 128, %s36, [#allocation6], 64, 64, 4
    $region9: #{tpu_custom_call.1} parent=1 // pred_fallthru
      _
    // Predicated region
    $region10: #{tpu_custom_call.1} parent=1 // pred_check
      _
    $region11: #{tpu_custom_call.1} parent=1 // pred_check_branch
      %43 = sbr.rel (0) target = $region13
    $region12: #{tpu_custom_call.1} parent=1 // pred_region
      _
    $region13: #{tpu_custom_call.1} parent=1 // pred_fallthru
      _
    // Predicated region
    $region14: #{tpu_custom_call.1} parent=1 // pred_check
      _
    $region15: #{tpu_custom_call.1} parent=1 // pred_check_branch
      %45 = sbr.rel (0) target = $region17
    $region16: #{tpu_custom_call.1} parent=1 // pred_region
      %47 = vsyncadd [#allocation6], 0
      %s48 = sshll.u32 %s3, 4
      %s49 = int_to_ptr.hbm [resolvable:$true] %s48
      %s50 = sshll.u32 [#allocation7], 4
      %s51 = int_to_ptr.vmem [resolvable:$true] %s50
      %56 = dma.hbm_to_vmem [thread:$0]  %s49, 1024, %s51, [#allocation6], 64, 64, 4
    $region17: #{tpu_custom_call.1} parent=1 // pred_fallthru
      _
    // Predicated region
    $region18: #{tpu_custom_call.1} parent=1 // pred_check
      _
    $region19: #{tpu_custom_call.1} parent=1 // pred_check_branch
      %58 = sbr.rel (0) target = $region21
    $region20: #{tpu_custom_call.1} parent=1 // pred_region
      _
    $region21: #{tpu_custom_call.1} parent=1 // pred_fallthru
      _
    // Predicated region
    $region22: #{tpu_custom_call.1} parent=1 // pred_check
      _
    $region23: #{tpu_custom_call.1} parent=1 // pred_check_branch
      %60 = sbr.rel (0) target = $region25
    $region24: #{tpu_custom_call.1} parent=1 // pred_region
      _
    $region25: #{tpu_custom_call.1} parent=1 // pred_fallthru
      _
    // Predicated region
    $region26: #{tpu_custom_call.1} parent=1 // pred_check
      _
    $region27: #{tpu_custom_call.1} parent=1 // pred_check_branch
      %62 = sbr.rel (0) target = $region29
    $region28: #{tpu_custom_call.1} parent=1 // pred_region
      _
    $region29: #{tpu_custom_call.1} parent=1 // pred_fallthru
      _
    // Predicated region
    $region30: #{tpu_custom_call.1} parent=1 // pred_check
      _
    $region31: #{tpu_custom_call.1} parent=1 // pred_check_branch
      %64 = sbr.rel (0) target = $region33
    $region32: #{tpu_custom_call.1} parent=1 // pred_region
      %66 = vsyncadd [#allocation9], 0
      %s67 = sshll.u32 %s7, 4
      %s68 = int_to_ptr.hbm [resolvable:$true] %s67
      %s69 = sshll.u32 [#allocation8], 4
      %s70 = int_to_ptr.vmem [resolvable:$true] %s69
      %75 = dma.hbm_to_vmem [thread:$0]  %s68, 1024, %s70, [#allocation9], 64, 64, 4
    $region33: #{tpu_custom_call.1} parent=1 // pred_fallthru
      _
    // Predicated region
    $region34: #{tpu_custom_call.1} parent=1 // pred_check
      _
    $region35: #{tpu_custom_call.1} parent=1 // pred_check_branch
      %77 = sbr.rel (0) target = $region37
    $region36: #{tpu_custom_call.1} parent=1 // pred_region
      _
    $region37: #{tpu_custom_call.1} parent=1 // pred_fallthru
      _
    // Predicated region
    $region38: #{tpu_custom_call.1} parent=1 // pred_check
      _
    $region39: #{tpu_custom_call.1} parent=1 // pred_check_branch
      %79 = sbr.rel (0) target = $region41
    $region40: #{tpu_custom_call.1} parent=1 // pred_region
      %81 = dma.done [#allocation3], 128
    $region41: #{tpu_custom_call.1} parent=1 // pred_fallthru
      _
    // Predicated region
    $region42: #{tpu_custom_call.1} parent=1 // pred_check
      _
    $region43: #{tpu_custom_call.1} parent=1 // pred_check_branch
      %83 = sbr.rel (0) target = $region45
    $region44: #{tpu_custom_call.1} parent=1 // pred_region
      %85 = dma.done [#allocation6], 128
    $region45: #{tpu_custom_call.1} parent=1 // pred_fallthru
      _
    // Predicated region
    $region46: #{tpu_custom_call.1} parent=1 // pred_check
      _
    $region47: #{tpu_custom_call.1} parent=1 // pred_check_branch
      %87 = sbr.rel (0) target = $region49
    $region48: #{tpu_custom_call.1} parent=1 // pred_region
      %89 = dma.done [#allocation6], 1024
    $region49: #{tpu_custom_call.1} parent=1 // pred_fallthru
      _
    // Predicated region
    $region50: #{tpu_custom_call.1} parent=1 // pred_check
      _
    $region51: #{tpu_custom_call.1} parent=1 // pred_check_branch
      %91 = sbr.rel (0) target = $region53
    $region52: #{tpu_custom_call.1} parent=1 // pred_region
      %93 = dma.done [#allocation9], 1024
    $region53: #{tpu_custom_call.1} parent=1 // pred_fallthru
      _
    %v95 = vld [vmem:[#allocation2] sm:$0xff]
    %v96 = vld [vmem:[#allocation5] sm:$0xf]
    %v97 = vld [vmem:[#allocation5 + $0x4] sm:$0xf]
    %v98 = vld [vmem:[%s2] sm:$0x1]
    %v99 = vpack.c.bf16 %v95, %v95
    %v101 = vperm.slane %v98, 0
    %v105 = vunpack.c.l.b16 %v96
    %v106 = vunpack.c.l.b16 %v97
    %v107 = vpack.c.b16 %v106, %v105
    %vm109 = vcmask 130048
    %v111 = vsel %vm109, %v99, 0
    %113 = vmatpush.bf16.msra.mxu0 0
    %114 = vmatpush.bf16.msra.mxu0 0
    %115 = vmatpush.bf16.msra.mxu0 0
    %116 = vmatpush.bf16.msra.mxu0 0
    %117 = vmatpush.bf16.msra.mxu0 0
    %118 = vmatpush.bf16.msra.mxu0 0
    %119 = vmatpush.bf16.msra.mxu0 0
    %120 = vmatpush.bf16.msra.mxu0 %v107
    %121 = vmatmul.bf16.gmra.mxu0 %v111
    %v122 = vpop.f32.mrf.mxu0
    %v123 = vadd.f32 %v101, %v122
    %v124 = vpop.f32.mrf.mxu0
    %125 = vdwg.mxu0
    %v126 = vmax.f32 %v123, 0.0
    %v127 = vld [vmem:[#allocation7] sm:$0xf]
    %v128 = vld [vmem:[#allocation7 + $0x4] sm:$0xf]
    %v129 = vld [vmem:[#allocation7 + $0x8] sm:$0xf]
    %v130 = vld [vmem:[#allocation7 + $0xc] sm:$0xf]
    %v131 = vld [vmem:[#allocation7 + $0x10] sm:$0xf]
    %v132 = vld [vmem:[#allocation7 + $0x14] sm:$0xf]
    %v133 = vld [vmem:[#allocation7 + $0x18] sm:$0xf]
    %v134 = vld [vmem:[#allocation7 + $0x1c] sm:$0xf]
    %v135 = vld [vmem:[#allocation7 + $0x20] sm:$0xf]
    %v136 = vld [vmem:[#allocation7 + $0x24] sm:$0xf]
    %v137 = vld [vmem:[#allocation7 + $0x28] sm:$0xf]
    %v138 = vld [vmem:[#allocation7 + $0x2c] sm:$0xf]
    %v139 = vld [vmem:[#allocation7 + $0x30] sm:$0xf]
    %v140 = vld [vmem:[#allocation7 + $0x34] sm:$0xf]
    %v141 = vld [vmem:[#allocation7 + $0x38] sm:$0xf]
    %v142 = vld [vmem:[#allocation7 + $0x3c] sm:$0xf]
    %v143 = vld [vmem:[%s4] sm:$0x1]
    %v144 = vpack.c.bf16 %v126, %v126
    %v146 = vperm.slane %v143, 0
    %v164 = vunpack.c.l.b16 %v127
    %v165 = vunpack.c.l.b16 %v128
    %v166 = vunpack.c.l.b16 %v129
    %v167 = vunpack.c.l.b16 %v130
    %v168 = vunpack.c.l.b16 %v131
    %v169 = vunpack.c.l.b16 %v132
    %v170 = vunpack.c.l.b16 %v133
    %v171 = vunpack.c.l.b16 %v134
    %v172 = vunpack.c.l.b16 %v135
    %v173 = vunpack.c.l.b16 %v136
    %v174 = vunpack.c.l.b16 %v137
    %v175 = vunpack.c.l.b16 %v138
    %v176 = vunpack.c.l.b16 %v139
    %v177 = vunpack.c.l.b16 %v140
    %v178 = vunpack.c.l.b16 %v141
    %v179 = vunpack.c.l.b16 %v142
    %v180 = vpack.c.b16 %v165, %v164
    %v181 = vpack.c.b16 %v167, %v166
    %v182 = vpack.c.b16 %v169, %v168
    %v183 = vpack.c.b16 %v171, %v170
    %v184 = vpack.c.b16 %v173, %v172
    %v185 = vpack.c.b16 %v175, %v174
    %v186 = vpack.c.b16 %v177, %v176
    %v187 = vpack.c.b16 %v179, %v178
    %196 = vmatpush.bf16.msra.mxu0 %v187
    %197 = vmatpush.bf16.msra.mxu0 %v186
    %198 = vmatpush.bf16.msra.mxu0 %v185
    %199 = vmatpush.bf16.msra.mxu0 %v184
    %200 = vmatpush.bf16.msra.mxu0 %v183
    %201 = vmatpush.bf16.msra.mxu0 %v182
    %202 = vmatpush.bf16.msra.mxu0 %v181
    %203 = vmatpush.bf16.msra.mxu0 %v180
    %204 = vmatmul.bf16.gmra.mxu0 %v144
    %v205 = vpop.f32.mrf.mxu0
    %v206 = vadd.f32 %v146, %v205
    %v207 = vpop.f32.mrf.mxu0
    %208 = vdwg.mxu0
    %v209 = vld [vmem:[%s5] sm:$0x1]
    %v210 = vld [vmem:[%s6] sm:$0x1]
    %211 = vadd.xlane.f32.xlu0 %v206
    %v212 = vpop.xlane.xlu0 %211
    %v213 = vmul.f32 %v206, %v206
    %214 = vadd.xlane.f32.xlu0 %v213
    %v215 = vpop.xlane.xlu0 %214
    %v216 = vmul.f32 %v212, 0.015625
    %v217 = vmul.f32 %v215, 0.015625
    %v218 = vmul.f32 %v216, %v216
    %v219 = vsub.f32 %v217, %v218
    %v220 = vmax.f32 %v219, 0.0
    %v221 = vsub.f32 %v206, %v216
    %v222 = vadd.f32 %v220, 1e-05
    %v223 = vrsqrt.pop %v222
    %v224 = vmul.f32 %v223, %v222
    %v225 = vmul.f32 %v224, %v223
    %v226 = vmul.f32 0.5, %v225
    %v227 = vsub.f32 1.5, %v226
    %v228 = vmul.f32 %v223, %v227
    %vm229 = vweird.f32 %v222
    %vm230 = vweird.f32 %v223
    %vm231 = vmor %vm229, %vm230
    %v232 = vsel %vm231, %v223, %v228
    %v233 = vmul.f32 %v221, %v232
    %v235 = vperm.slane %v209, 0
    %v237 = vmul.f32 %v233, %v235
    %v239 = vperm.slane %v210, 0
    %v241 = vadd.f32 %v237, %v239
    %v242 = vmax.f32 %v241, 0.0
    %v243 = vld [vmem:[#allocation8] sm:$0xf]
    %v244 = vld [vmem:[#allocation8 + $0x4] sm:$0xf]
    %v245 = vld [vmem:[#allocation8 + $0x8] sm:$0xf]
    %v246 = vld [vmem:[#allocation8 + $0xc] sm:$0xf]
    %v247 = vld [vmem:[#allocation8 + $0x10] sm:$0xf]
    %v248 = vld [vmem:[#allocation8 + $0x14] sm:$0xf]
    %v249 = vld [vmem:[#allocation8 + $0x18] sm:$0xf]
    %v250 = vld [vmem:[#allocation8 + $0x1c] sm:$0xf]
    %v251 = vld [vmem:[#allocation8 + $0x20] sm:$0xf]
    %v252 = vld [vmem:[#allocation8 + $0x24] sm:$0xf]
    %v253 = vld [vmem:[#allocation8 + $0x28] sm:$0xf]
    %v254 = vld [vmem:[#allocation8 + $0x2c] sm:$0xf]
    %v255 = vld [vmem:[#allocation8 + $0x30] sm:$0xf]
    %v256 = vld [vmem:[#allocation8 + $0x34] sm:$0xf]
    %v257 = vld [vmem:[#allocation8 + $0x38] sm:$0xf]
    %v258 = vld [vmem:[#allocation8 + $0x3c] sm:$0xf]
    %v259 = vld [vmem:[%s8] sm:$0x1]
    %v260 = vpack.c.bf16 %v242, %v242
    %v262 = vperm.slane %v259, 0
    %v280 = vunpack.c.l.b16 %v243
    %v281 = vunpack.c.l.b16 %v244
    %v282 = vunpack.c.l.b16 %v245
    %v283 = vunpack.c.l.b16 %v246
    %v284 = vunpack.c.l.b16 %v247
    %v285 = vunpack.c.l.b16 %v248
    %v286 = vunpack.c.l.b16 %v249
    %v287 = vunpack.c.l.b16 %v250
    %v288 = vunpack.c.l.b16 %v251
    %v289 = vunpack.c.l.b16 %v252
    %v290 = vunpack.c.l.b16 %v253
    %v291 = vunpack.c.l.b16 %v254
    %v292 = vunpack.c.l.b16 %v255
    %v293 = vunpack.c.l.b16 %v256
    %v294 = vunpack.c.l.b16 %v257
    %v295 = vunpack.c.l.b16 %v258
    %v296 = vpack.c.b16 %v281, %v280
    %v297 = vpack.c.b16 %v283, %v282
    %v298 = vpack.c.b16 %v285, %v284
    %v299 = vpack.c.b16 %v287, %v286
    %v300 = vpack.c.b16 %v289, %v288
    %v301 = vpack.c.b16 %v291, %v290
    %v302 = vpack.c.b16 %v293, %v292
    %v303 = vpack.c.b16 %v295, %v294
    %312 = vmatpush.bf16.msra.mxu0 %v303
    %313 = vmatpush.bf16.msra.mxu0 %v302
    %314 = vmatpush.bf16.msra.mxu0 %v301
    %315 = vmatpush.bf16.msra.mxu0 %v300
    %316 = vmatpush.bf16.msra.mxu0 %v299
    %317 = vmatpush.bf16.msra.mxu0 %v298
    %318 = vmatpush.bf16.msra.mxu0 %v297
    %319 = vmatpush.bf16.msra.mxu0 %v296
    %320 = vmatmul.bf16.gmra.mxu0 %v260
    %v321 = vpop.f32.mrf.mxu0
    %v322 = vadd.f32 %v262, %v321
    %v323 = vpop.f32.mrf.mxu0
    %324 = vdwg.mxu0
    %325 = vst [vmem:[#allocation10] sm:$0xff] %v322
    // Predicated region
    $region54: #{tpu_custom_call.1} parent=1 // pred_check
      _
    $region55: #{tpu_custom_call.1} parent=1 // pred_check_branch
      %327 = sbr.rel (0) target = $region57
    $region56: #{tpu_custom_call.1} parent=1 // pred_region
      %329 = vsyncadd [#allocation4], 0
      %s331 = sshll.u32 [#allocation10], 4
      %s332 = int_to_ptr.vmem [resolvable:$true] %s331
      %s333 = sshll.u32 %s9, 4
      %s334 = int_to_ptr.hbm [resolvable:$true] %s333
      %336 = dma.vmem_to_hbm [thread:$0]  %s332, 128, %s334, [#allocation4]
    $region57: #{tpu_custom_call.1} parent=1 // pred_fallthru
      _
    // Predicated region
    $region58: #{tpu_custom_call.1} parent=1 // pred_check
      _
    $region59: #{tpu_custom_call.1} parent=1 // pred_check_branch
      %338 = sbr.rel (0) target = $region61
    $region60: #{tpu_custom_call.1} parent=1 // pred_region
      %340 = dma.done [#allocation4], 128
    $region61: #{tpu_custom_call.1} parent=1 // pred_fallthru
      _
    %341 = vsyncpa [#allocation3], 1
    %342 = vsyncpa [#allocation6], 1
    %343 = vsyncpa [#allocation9], 1
    %344 = vsyncpa [#allocation4], 1

</llo_original>
